<compile_context>
chip_gen: v6e
topology: v6e:2x2x1
jax: 0.10.0
libtpu: 0.0.40
codegen_flags: <defaults>
</compile_context>

<pallas_src>
import functools

import jax
import jax.numpy as jnp
from jax.experimental import pallas as pl
from jax.experimental.pallas import tpu as pltpu

BN_EPS = 1e-5
LANE = 128


def _round_up(n, m=LANE):
    return ((n + m - 1) // m) * m


# ---------------------------------------------------------------------------
# Fused kernel
# ---------------------------------------------------------------------------
def make_generator_kernel(n_hidden, matmul_dtype=jnp.float32):
    """Builds the fused generator kernel for `n_hidden` hidden blocks.

    Ref order:
        z_ref,
        (w_i, gamma_i, beta_i)  for each hidden block   (hidden bias dropped:
                                                         cancelled by BN mean),
        w_out, b_out,
        o_ref
    """

    def kernel(*refs):
        z_ref = refs[0]
        o_ref = refs[-1]
        h = z_ref[...]                                       # (B, 128k) f32
        idx = 1
        for _ in range(n_hidden):
            w = refs[idx][...]
            gamma = refs[idx + 1][...]
            beta = refs[idx + 2][...]
            idx += 3
            # Linear (no bias: it is cancelled by the BN mean subtraction).
            a = jnp.dot(h.astype(matmul_dtype), w.astype(matmul_dtype),
                        preferred_element_type=jnp.float32)  # (B, N) f32
            # BatchNorm1d, training mode: per-feature stats over the batch
            # axis, biased variance, eps=1e-5.  Elementwise math kept in f32
            # (fast path on v5e which has no bf16 VPU/EUP).
            mean = jnp.mean(a, axis=0, keepdims=True)        # (1, N)
            var = jnp.mean((a - mean) * (a - mean), axis=0, keepdims=True)
            a = (a - mean) * jax.lax.rsqrt(var + BN_EPS)
            a = a * gamma + beta
            h = jnp.maximum(a, 0.0)                          # ReLU
        w_out = refs[idx][...]
        b_out = refs[idx + 1][...]
        y = jnp.dot(h.astype(matmul_dtype), w_out.astype(matmul_dtype),
                    preferred_element_type=jnp.float32) + b_out
        o_ref[...] = jnp.tanh(y).astype(o_ref.dtype)

    return kernel


# ---------------------------------------------------------------------------
# pallas_call wrapper
# ---------------------------------------------------------------------------
def _full_spec(shape):
    # Full-extent block (exempt from the (8,128) divisibility rule); no grid.
    return pl.BlockSpec(shape, lambda: (0,) * len(shape))


def generator_pallas(kernel_params, z_padded, matmul_dtype=jnp.float32):
    hidden = kernel_params["hidden"]
    w_out, b_out = kernel_params["out"]
    n_hidden = len(hidden)

    flat_inputs = [z_padded]
    in_specs = [_full_spec(z_padded.shape)]
    for (w, g, beta) in hidden:
        flat_inputs += [w, g, beta]
        in_specs += [_full_spec(w.shape), _full_spec(g.shape),
                     _full_spec(beta.shape)]
    flat_inputs += [w_out, b_out]
    in_specs += [_full_spec(w_out.shape), _full_spec(b_out.shape)]

    B = z_padded.shape[0]
    n_out_p = w_out.shape[1]

    return pl.pallas_call(
        make_generator_kernel(n_hidden, matmul_dtype),
        out_shape=jax.ShapeDtypeStruct((B, n_out_p), jnp.float32),
        in_specs=in_specs,
        out_specs=_full_spec((B, n_out_p)),
        compiler_params=pltpu.CompilerParams(vmem_limit_bytes=32 << 20),
    )(*flat_inputs)


# ---------------------------------------------------------------------------
# Parameters: PyTorch-style init + lane-padded kernel parameters
# ---------------------------------------------------------------------------
def init_generator_params(key, z_dim, gen_hidden_dims, output_dim):
    """Synthetic init mirroring the module's parameter shapes (w as (in,out))."""
    params = {"hidden": [], "out": None}
    in_dim = z_dim
    for h_dim in gen_hidden_dims:
        key, kw, kb = jax.random.split(key, 3)
        bound = 1.0 / float(in_dim) ** 0.5
        w = jax.random.uniform(kw, (in_dim, h_dim), jnp.float32, -bound, bound)
        b = jax.random.uniform(kb, (1, h_dim), jnp.float32, -bound, bound)
        gamma = jnp.ones((1, h_dim), jnp.float32)   # BatchNorm1d default init
        beta = jnp.zeros((1, h_dim), jnp.float32)
        params["hidden"].append((w, b, gamma, beta))
        in_dim = h_dim
    key, kw, kb = jax.random.split(key, 3)
    bound = 1.0 / float(in_dim) ** 0.5
    w_out = jax.random.uniform(kw, (in_dim, output_dim), jnp.float32, -bound, bound)
    b_out = jax.random.uniform(kb, (1, output_dim), jnp.float32, -bound, bound)
    params["out"] = (w_out, b_out)
    return params


def pad_params_for_kernel(params):
    """Zero-pad all feature dims to multiples of 128 lanes and drop the
    (mathematically redundant) hidden-layer Linear biases."""
    padded = {"hidden": [], "out": None}
    for (w, _b, gamma, beta) in params["hidden"]:
        kin, kout = w.shape
        kin_p, kout_p = _round_up(kin), _round_up(kout)
        w_p = jnp.pad(w, ((0, kin_p - kin), (0, kout_p - kout)))
        g_p = jnp.pad(gamma, ((0, 0), (0, kout_p - kout)), constant_values=1.0)
        be_p = jnp.pad(beta, ((0, 0), (0, kout_p - kout)))
        padded["hidden"].append((w_p, g_p, be_p))
    w_out, b_out = params["out"]
    kin, kout = w_out.shape
    kin_p, kout_p = _round_up(kin), _round_up(kout)
    padded["out"] = (jnp.pad(w_out, ((0, kin_p - kin), (0, kout_p - kout))),
                     jnp.pad(b_out, ((0, 0), (0, kout_p - kout))))
    return padded


# ---------------------------------------------------------------------------
# Forward + pure-JAX reference
# ---------------------------------------------------------------------------
@functools.partial(jax.jit, static_argnames=("output_dim", "matmul_dtype"))
def generator_forward(kernel_params, z, output_dim, matmul_dtype=jnp.float32):
    B, zdim = z.shape
    # Lane-pad the input features only; the batch axis is left untouched
    # because BN statistics are computed over it.
    z_p = jnp.pad(z, ((0, 0), (0, _round_up(zdim) - zdim)))
    out_p = generator_pallas(kernel_params, z_p, matmul_dtype)
    return out_p[:, :output_dim]


def generator_reference(params, z):
    """Pure-JAX reference matching the PyTorch module (hidden biases kept)."""
    h = z
    for (w, b, gamma, beta) in params["hidden"]:
        a = h @ w + b
        mean = jnp.mean(a, axis=0, keepdims=True)
        var = jnp.mean((a - mean) ** 2, axis=0, keepdims=True)
        a = (a - mean) / jnp.sqrt(var + BN_EPS) * gamma + beta
        h = jnp.maximum(a, 0.0)
    w_out, b_out = params["out"]
    return jnp.tanh(h @ w_out + b_out)


# ---------------------------------------------------------------------------
if __name__ == "__main__":
    key = jax.random.PRNGKey(0)
    k_params, k_z = jax.random.split(key)

    batch = 8            # for real workloads B >= 128 feeds the MXU much better
    z_dim = 16
    gen_hidden_dims = (32, 64)
    output_dim = 24

    params = init_generator_params(k_params, z_dim, gen_hidden_dims, output_dim)
    kparams = pad_params_for_kernel(params)
    z = jax.random.normal(k_z, (batch, z_dim), jnp.float32)

    ref = generator_reference(params, z)

    # f32 MXU-operand path (matches the PyTorch module numerics).
    out = generator_forward(kparams, z, output_dim)
    out = jax.block_until_ready(out)
    assert out.shape == (batch, output_dim), out.shape
    assert jnp.allclose(out, ref, atol=1e-4, rtol=1e-4), "f32 mismatch vs reference"

    # bf16 MXU-operand path (fast path on v6e/v7x); f32 accumulation + f32 BN.
    out_bf16 = generator_forward(kparams, z, output_dim, matmul_dtype=jnp.bfloat16)
    out_bf16 = jax.block_until_ready(out_bf16)
    assert out_bf16.shape == (batch, output_dim), out_bf16.shape
    assert jnp.allclose(out_bf16, ref, atol=0.1, rtol=0.0), "bf16 sanity check failed"

    print("KERNEL_OK")
</pallas_src>

<mosaic_0001>
module attributes {stable_mosaic.version = 11 : i64} {
  func.func @kernel(%arg0: memref<8x128xf32, #tpu.memory_space<vmem>>, %arg1: memref<128x128xf32, #tpu.memory_space<vmem>>, %arg2: memref<1x128xf32, #tpu.memory_space<vmem>>, %arg3: memref<1x128xf32, #tpu.memory_space<vmem>>, %arg4: memref<128x128xf32, #tpu.memory_space<vmem>>, %arg5: memref<1x128xf32, #tpu.memory_space<vmem>>, %arg6: memref<1x128xf32, #tpu.memory_space<vmem>>, %arg7: memref<128x128xf32, #tpu.memory_space<vmem>>, %arg8: memref<1x128xf32, #tpu.memory_space<vmem>>, %arg9: memref<8x128xf32, #tpu.memory_space<vmem>>) attributes {dimension_semantics = [], scalar_prefetch = 0 : i64, scratch_operands = 0 : i64, tpu.core_type = #tpu.core_type<tc>} {
    %c0 = arith.constant 0 : index
    %c0_0 = arith.constant 0 : index
    %0 = vector.load %arg0[%c0, %c0_0] : memref<8x128xf32, #tpu.memory_space<vmem>>, vector<8x128xf32>
    %c0_1 = arith.constant 0 : index
    %c0_2 = arith.constant 0 : index
    %1 = vector.load %arg1[%c0_1, %c0_2] : memref<128x128xf32, #tpu.memory_space<vmem>>, vector<128x128xf32>
    %c0_3 = arith.constant 0 : index
    %c0_4 = arith.constant 0 : index
    %2 = vector.load %arg2[%c0_3, %c0_4] : memref<1x128xf32, #tpu.memory_space<vmem>>, vector<1x128xf32>
    %c0_5 = arith.constant 0 : index
    %c0_6 = arith.constant 0 : index
    %3 = vector.load %arg3[%c0_5, %c0_6] : memref<1x128xf32, #tpu.memory_space<vmem>>, vector<1x128xf32>
    %cst = arith.constant dense<0.000000e+00> : vector<8x128xf32>
    %4 = tpu.matmul %0, %1, %cst {dimension_numbers = #tpu.dot_dimension_numbers<[1], [0], [0], [1], [0, 0, 1, 1], [], []>} : vector<8x128xf32>, vector<128x128xf32>, vector<8x128xf32> -> vector<8x128xf32>
    %cst_7 = arith.constant dense<0.000000e+00> : vector<128xf32>
    %5 = vector.multi_reduction <add>, %4, %cst_7 [0] : vector<8x128xf32> to vector<128xf32>
    %6 = vector.shape_cast %5 : vector<128xf32> to vector<1x128xf32>
    %cst_8 = arith.constant 8.000000e+00 : f32
    %7 = vector.broadcast %cst_8 : f32 to vector<1x128xf32>
    %8 = arith.divf %6, %7 : vector<1x128xf32>
    %9 = vector.broadcast %8 : vector<1x128xf32> to vector<8x128xf32>
    %10 = arith.subf %4, %9 : vector<8x128xf32>
    %11 = vector.broadcast %8 : vector<1x128xf32> to vector<8x128xf32>
    %12 = arith.subf %4, %11 : vector<8x128xf32>
    %13 = arith.mulf %10, %12 : vector<8x128xf32>
    %cst_9 = arith.constant dense<0.000000e+00> : vector<128xf32>
    %14 = vector.multi_reduction <add>, %13, %cst_9 [0] : vector<8x128xf32> to vector<128xf32>
    %15 = vector.shape_cast %14 : vector<128xf32> to vector<1x128xf32>
    %cst_10 = arith.constant 8.000000e+00 : f32
    %16 = vector.broadcast %cst_10 : f32 to vector<1x128xf32>
    %17 = arith.divf %15, %16 : vector<1x128xf32>
    %18 = vector.broadcast %8 : vector<1x128xf32> to vector<8x128xf32>
    %19 = arith.subf %4, %18 : vector<8x128xf32>
    %cst_11 = arith.constant 9.99999974E-6 : f32
    %20 = vector.broadcast %cst_11 : f32 to vector<1x128xf32>
    %21 = arith.addf %17, %20 : vector<1x128xf32>
    %22 = math.rsqrt %21 : vector<1x128xf32>
    %23 = vector.broadcast %22 : vector<1x128xf32> to vector<8x128xf32>
    %24 = arith.mulf %19, %23 : vector<8x128xf32>
    %25 = vector.broadcast %2 : vector<1x128xf32> to vector<8x128xf32>
    %26 = arith.mulf %24, %25 : vector<8x128xf32>
    %27 = vector.broadcast %3 : vector<1x128xf32> to vector<8x128xf32>
    %28 = arith.addf %26, %27 : vector<8x128xf32>
    %cst_12 = arith.constant 0.000000e+00 : f32
    %29 = vector.broadcast %cst_12 : f32 to vector<8x128xf32>
    %30 = arith.maximumf %28, %29 : vector<8x128xf32>
    %c0_13 = arith.constant 0 : index
    %c0_14 = arith.constant 0 : index
    %31 = vector.load %arg4[%c0_13, %c0_14] : memref<128x128xf32, #tpu.memory_space<vmem>>, vector<128x128xf32>
    %c0_15 = arith.constant 0 : index
    %c0_16 = arith.constant 0 : index
    %32 = vector.load %arg5[%c0_15, %c0_16] : memref<1x128xf32, #tpu.memory_space<vmem>>, vector<1x128xf32>
    %c0_17 = arith.constant 0 : index
    %c0_18 = arith.constant 0 : index
    %33 = vector.load %arg6[%c0_17, %c0_18] : memref<1x128xf32, #tpu.memory_space<vmem>>, vector<1x128xf32>
    %cst_19 = arith.constant dense<0.000000e+00> : vector<8x128xf32>
    %34 = tpu.matmul %30, %31, %cst_19 {dimension_numbers = #tpu.dot_dimension_numbers<[1], [0], [0], [1], [0, 0, 1, 1], [], []>} : vector<8x128xf32>, vector<128x128xf32>, vector<8x128xf32> -> vector<8x128xf32>
    %cst_20 = arith.constant dense<0.000000e+00> : vector<128xf32>
    %35 = vector.multi_reduction <add>, %34, %cst_20 [0] : vector<8x128xf32> to vector<128xf32>
    %36 = vector.shape_cast %35 : vector<128xf32> to vector<1x128xf32>
    %cst_21 = arith.constant 8.000000e+00 : f32
    %37 = vector.broadcast %cst_21 : f32 to vector<1x128xf32>
    %38 = arith.divf %36, %37 : vector<1x128xf32>
    %39 = vector.broadcast %38 : vector<1x128xf32> to vector<8x128xf32>
    %40 = arith.subf %34, %39 : vector<8x128xf32>
    %41 = vector.broadcast %38 : vector<1x128xf32> to vector<8x128xf32>
    %42 = arith.subf %34, %41 : vector<8x128xf32>
    %43 = arith.mulf %40, %42 : vector<8x128xf32>
    %cst_22 = arith.constant dense<0.000000e+00> : vector<128xf32>
    %44 = vector.multi_reduction <add>, %43, %cst_22 [0] : vector<8x128xf32> to vector<128xf32>
    %45 = vector.shape_cast %44 : vector<128xf32> to vector<1x128xf32>
    %cst_23 = arith.constant 8.000000e+00 : f32
    %46 = vector.broadcast %cst_23 : f32 to vector<1x128xf32>
    %47 = arith.divf %45, %46 : vector<1x128xf32>
    %48 = vector.broadcast %38 : vector<1x128xf32> to vector<8x128xf32>
    %49 = arith.subf %34, %48 : vector<8x128xf32>
    %cst_24 = arith.constant 9.99999974E-6 : f32
    %50 = vector.broadcast %cst_24 : f32 to vector<1x128xf32>
    %51 = arith.addf %47, %50 : vector<1x128xf32>
    %52 = math.rsqrt %51 : vector<1x128xf32>
    %53 = vector.broadcast %52 : vector<1x128xf32> to vector<8x128xf32>
    %54 = arith.mulf %49, %53 : vector<8x128xf32>
    %55 = vector.broadcast %32 : vector<1x128xf32> to vector<8x128xf32>
    %56 = arith.mulf %54, %55 : vector<8x128xf32>
    %57 = vector.broadcast %33 : vector<1x128xf32> to vector<8x128xf32>
    %58 = arith.addf %56, %57 : vector<8x128xf32>
    %cst_25 = arith.constant 0.000000e+00 : f32
    %59 = vector.broadcast %cst_25 : f32 to vector<8x128xf32>
    %60 = arith.maximumf %58, %59 : vector<8x128xf32>
    %c0_26 = arith.constant 0 : index
    %c0_27 = arith.constant 0 : index
    %61 = vector.load %arg7[%c0_26, %c0_27] : memref<128x128xf32, #tpu.memory_space<vmem>>, vector<128x128xf32>
    %c0_28 = arith.constant 0 : index
    %c0_29 = arith.constant 0 : index
    %62 = vector.load %arg8[%c0_28, %c0_29] : memref<1x128xf32, #tpu.memory_space<vmem>>, vector<1x128xf32>
    %cst_30 = arith.constant dense<0.000000e+00> : vector<8x128xf32>
    %63 = tpu.matmul %60, %61, %cst_30 {dimension_numbers = #tpu.dot_dimension_numbers<[1], [0], [0], [1], [0, 0, 1, 1], [], []>} : vector<8x128xf32>, vector<128x128xf32>, vector<8x128xf32> -> vector<8x128xf32>
    %64 = vector.broadcast %62 : vector<1x128xf32> to vector<8x128xf32>
    %65 = arith.addf %63, %64 : vector<8x128xf32>
    %66 = math.tanh %65 : vector<8x128xf32>
    %c0_31 = arith.constant 0 : index
    %c0_32 = arith.constant 0 : index
    %67 = vector.load %arg9[%c0_31, %c0_32] : memref<8x128xf32, #tpu.memory_space<vmem>>, vector<8x128xf32>
    tpu.vector_store %arg9[%c0_31, %c0_32], %66 {strides = array<i32>} : memref<8x128xf32, #tpu.memory_space<vmem>>, vector<8x128xf32>,
    return
  }
}

</mosaic_0001>

<llo_original>
// kernel: generator_forward.1
$region0: #{generator_forward.1}
  #allocation0 [shape = 'u32[]', space=smem, size = 0x4, offset = 0x4, fixed_abs, tag = 'smem constant byte address 0x4 - core index']
  #allocation1 [shape = 'u32[144,128]{1,0:T(1,128)}', space=vmem, size = 0x12000, scoped, tag = 'internal scratch']
  %s0 = inlined_call_operand.vmem [shape: f32[8,128], index: 0, kind: input, shape index: {}]
  %s1 = inlined_call_operand.hbm [shape: f32[128,128], index: 1, kind: input, shape index: {}]
  %s2 = inlined_call_operand.vmem [shape: f32[1,128], index: 2, kind: input, shape index: {}]
  %s3 = inlined_call_operand.vmem [shape: f32[1,128], index: 3, kind: input, shape index: {}]
  %s4 = inlined_call_operand.hbm [shape: f32[128,128], index: 4, kind: input, shape index: {}]
  %s5 = inlined_call_operand.vmem [shape: f32[1,128], index: 5, kind: input, shape index: {}]
  %s6 = inlined_call_operand.vmem [shape: f32[1,128], index: 6, kind: input, shape index: {}]
  %s7 = inlined_call_operand.hbm [shape: f32[128,128], index: 7, kind: input, shape index: {}]
  %s8 = inlined_call_operand.vmem [shape: f32[1,128], index: 8, kind: input, shape index: {}]
  %s9 = inlined_call_operand.hbm [shape: f32[8,128], index: 9, kind: output, shape index: {}]
  %s10 = sld [smem:[#allocation0]]
  $region58: #{generator_forward.1} parent=0
    _
  %s12 = ssub.s32 1, %s10
  %s13 = scalar_select 0, %s12, %s10
  $region1: #{generator_forward.1} parent=0
    #allocation2 [shape = 'u8[65536]{0}', space=vmem, size = 0x10000, scoped, tag = 'input window, operand 1, single buffered']
    #allocation3 [shape = 's32[1]{0}', space=sflag, size = 0x4, scoped, tag = 'scoped memory for generator_forward.1']
    #allocation4 [shape = 's32[1]{0}', space=sflag, size = 0x4, scoped, tag = 'scoped memory for generator_forward.1']
    #allocation5 [shape = 'u8[65536]{0}', space=vmem, size = 0x10000, scoped, tag = 'input window, operand 4, single buffered']
    #allocation6 [shape = 's32[1]{0}', space=sflag, size = 0x4, scoped, tag = 'scoped memory for generator_forward.1']
    #allocation7 [shape = 'u8[65536]{0}', space=vmem, size = 0x10000, scoped, tag = 'input window, operand 7, single buffered']
    #allocation8 [shape = 'u8[4096]{0}', space=vmem, size = 0x1000, scoped, tag = 'output window, operand 0, single buffered']
    %14 = vsyncpa [#allocation3], 0
    %15 = vsyncpa [#allocation6], 0
    %16 = vsyncpa [#allocation4], 0
    // Predicated region
    $region2: #{generator_forward.1} parent=1 // pred_check
      _
    $region3: #{generator_forward.1} parent=1 // pred_check_branch
      %18 = sbr.rel (0) target = $region5
    $region4: #{generator_forward.1} parent=1 // pred_region
      _
    $region5: #{generator_forward.1} parent=1 // pred_fallthru
      _
    // Predicated region
    $region6: #{generator_forward.1} parent=1 // pred_check
      _
    $region7: #{generator_forward.1} parent=1 // pred_check_branch
      %20 = sbr.rel (0) target = $region9
    $region8: #{generator_forward.1} parent=1 // pred_region
      %s22 = ssub.s32 2048, 2048
      %23 = vsyncadd [#allocation3], %s22
      %s24 = sshll.u32 [#allocation2], 4
      %s25 = int_to_ptr.vmem [resolvable:$true] %s24
      %30 = dma.hbm_to_vmem [thread:$0]  %s1, 2048, %s25, [#allocation3], 128, 128, 8
    $region9: #{generator_forward.1} parent=1 // pred_fallthru
      _
    // Predicated region
    $region10: #{generator_forward.1} parent=1 // pred_check
      _
    $region11: #{generator_forward.1} parent=1 // pred_check_branch
      %32 = sbr.rel (0) target = $region13
    $region12: #{generator_forward.1} parent=1 // pred_region
      _
    $region13: #{generator_forward.1} parent=1 // pred_fallthru
      _
    // Predicated region
    $region14: #{generator_forward.1} parent=1 // pred_check
      _
    $region15: #{generator_forward.1} parent=1 // pred_check_branch
      %34 = sbr.rel (0) target = $region17
    $region16: #{generator_forward.1} parent=1 // pred_region
      _
    $region17: #{generator_forward.1} parent=1 // pred_fallthru
      _
    // Predicated region
    $region18: #{generator_forward.1} parent=1 // pred_check
      _
    $region19: #{generator_forward.1} parent=1 // pred_check_branch
      %36 = sbr.rel (0) target = $region21
    $region20: #{generator_forward.1} parent=1 // pred_region
      %s38 = ssub.s32 2048, 2048
      %39 = vsyncadd [#allocation6], %s38
      %s40 = sshll.u32 [#allocation5], 4
      %s41 = int_to_ptr.vmem [resolvable:$true] %s40
      %46 = dma.hbm_to_vmem [thread:$0]  %s4, 2048, %s41, [#allocation6], 128, 128, 8
    $region21: #{generator_forward.1} parent=1 // pred_fallthru
      _
    // Predicated region
    $region22: #{generator_forward.1} parent=1 // pred_check
      _
    $region23: #{generator_forward.1} parent=1 // pred_check_branch
      %48 = sbr.rel (0) target = $region25
    $region24: #{generator_forward.1} parent=1 // pred_region
      _
    $region25: #{generator_forward.1} parent=1 // pred_fallthru
      _
    // Predicated region
    $region26: #{generator_forward.1} parent=1 // pred_check
      _
    $region27: #{generator_forward.1} parent=1 // pred_check_branch
      %50 = sbr.rel (0) target = $region29
    $region28: #{generator_forward.1} parent=1 // pred_region
      _
    $region29: #{generator_forward.1} parent=1 // pred_fallthru
      _
    // Predicated region
    $region30: #{generator_forward.1} parent=1 // pred_check
      _
    $region31: #{generator_forward.1} parent=1 // pred_check_branch
      %52 = sbr.rel (0) target = $region33
    $region32: #{generator_forward.1} parent=1 // pred_region
      %s54 = ssub.s32 2048, 2048
      %55 = vsyncadd [#allocation6], %s54
      %s56 = sshll.u32 [#allocation7], 4
      %s57 = int_to_ptr.vmem [resolvable:$true] %s56
      %62 = dma.hbm_to_vmem [thread:$0]  %s7, 2048, %s57, [#allocation6], 128, 128, 8
    $region33: #{generator_forward.1} parent=1 // pred_fallthru
      _
    // Predicated region
    $region34: #{generator_forward.1} parent=1 // pred_check
      _
    $region35: #{generator_forward.1} parent=1 // pred_check_branch
      %64 = sbr.rel (0) target = $region37
    $region36: #{generator_forward.1} parent=1 // pred_region
      _
    $region37: #{generator_forward.1} parent=1 // pred_fallthru
      _
    // Predicated region
    $region38: #{generator_forward.1} parent=1 // pred_check
      _
    $region39: #{generator_forward.1} parent=1 // pred_check_branch
      %66 = sbr.rel (0) target = $region41
    $region40: #{generator_forward.1} parent=1 // pred_region
      %67 = dma.done [#allocation3], 2048
    $region41: #{generator_forward.1} parent=1 // pred_fallthru
      _
    // Predicated region
    $region42: #{generator_forward.1} parent=1 // pred_check
      _
    $region43: #{generator_forward.1} parent=1 // pred_check_branch
      %69 = sbr.rel (0) target = $region45
    $region44: #{generator_forward.1} parent=1 // pred_region
      %70 = dma.done [#allocation6], 2048
    $region45: #{generator_forward.1} parent=1 // pred_fallthru
      _
    // Predicated region
    $region46: #{generator_forward.1} parent=1 // pred_check
      _
    $region47: #{generator_forward.1} parent=1 // pred_check_branch
      %72 = sbr.rel (0) target = $region49
    $region48: #{generator_forward.1} parent=1 // pred_region
      %73 = dma.done [#allocation6], 2048
    $region49: #{generator_forward.1} parent=1 // pred_fallthru
      _
    %v74 = vld [vmem:[%s0] sm:$0xff]
    %v75 = vld [vmem:[#allocation2] sm:$0xff]
    %v76 = vld [vmem:[#allocation2 + $0x8] sm:$0xff]
    %v77 = vld [vmem:[#allocation2 + $0x10] sm:$0xff]
    %v78 = vld [vmem:[#allocation2 + $0x18] sm:$0xff]
    %v79 = vld [vmem:[#allocation2 + $0x20] sm:$0xff]
    %v80 = vld [vmem:[#allocation2 + $0x28] sm:$0xff]
    %v81 = vld [vmem:[#allocation2 + $0x30] sm:$0xff]
    %v82 = vld [vmem:[#allocation2 + $0x38] sm:$0xff]
    %v83 = vld [vmem:[#allocation2 + $0x40] sm:$0xff]
    %v84 = vld [vmem:[#allocation2 + $0x48] sm:$0xff]
    %v85 = vld [vmem:[#allocation2 + $0x50] sm:$0xff]
    %v86 = vld [vmem:[#allocation2 + $0x58] sm:$0xff]
    %v87 = vld [vmem:[#allocation2 + $0x60] sm:$0xff]
    %v88 = vld [vmem:[#allocation2 + $0x68] sm:$0xff]
    %v89 = vld [vmem:[#allocation2 + $0x70] sm:$0xff]
    %v90 = vld [vmem:[#allocation2 + $0x78] sm:$0xff]
    %v91 = vld [vmem:[%s2] sm:$0x1]
    %v92 = vld [vmem:[%s3] sm:$0x1]
    %93 = vmatprep.subr.mxu0 0.0
    %94 = vmatpush1.msra.mxu0 %v90
    %95 = vmatprep.subr.mxu0 0.0
    %96 = vmatpush1.msra.mxu0 %v89
    %97 = vmatprep.subr.mxu0 0.0
    %98 = vmatpush1.msra.mxu0 %v88
    %99 = vmatprep.subr.mxu0 0.0
    %100 = vmatpush1.msra.mxu0 %v87
    %101 = vmatprep.subr.mxu0 0.0
    %102 = vmatpush1.msra.mxu0 %v86
    %103 = vmatprep.subr.mxu0 0.0
    %104 = vmatpush1.msra.mxu0 %v85
    %105 = vmatprep.subr.mxu0 0.0
    %106 = vmatpush1.msra.mxu0 %v84
    %107 = vmatprep.subr.mxu0 0.0
    %108 = vmatpush1.msra.mxu0 %v83
    %109 = vmatprep.subr.mxu0 0.0
    %110 = vmatpush1.msra.mxu0 %v82
    %111 = vmatprep.subr.mxu0 0.0
    %112 = vmatpush1.msra.mxu0 %v81
    %113 = vmatprep.subr.mxu0 0.0
    %114 = vmatpush1.msra.mxu0 %v80
    %115 = vmatprep.subr.mxu0 0.0
    %116 = vmatpush1.msra.mxu0 %v79
    %117 = vmatprep.subr.mxu0 0.0
    %118 = vmatpush1.msra.mxu0 %v78
    %119 = vmatprep.subr.mxu0 0.0
    %120 = vmatpush1.msra.mxu0 %v77
    %121 = vmatprep.subr.mxu0 0.0
    %122 = vmatpush1.msra.mxu0 %v76
    %123 = vmatprep.subr.mxu0 0.0
    %124 = vmatpush1.msra.mxu0 %v75
    %125 = vmatprep.subr.mxu0 0.0
    %126 = vmatpush2.msra.mxu0 0.0
    %127 = vmatprep.subr.mxu0 0.0
    %128 = vmatpush2.msra.mxu0 0.0
    %129 = vmatprep.subr.mxu0 0.0
    %130 = vmatpush2.msra.mxu0 0.0
    %131 = vmatprep.subr.mxu0 0.0
    %132 = vmatpush2.msra.mxu0 0.0
    %133 = vmatprep.subr.mxu0 0.0
    %134 = vmatpush2.msra.mxu0 0.0
    %135 = vmatprep.subr.mxu0 0.0
    %136 = vmatpush2.msra.mxu0 0.0
    %137 = vmatprep.subr.mxu0 0.0
    %138 = vmatpush2.msra.mxu0 0.0
    %139 = vmatprep.subr.mxu0 0.0
    %140 = vmatpush2.msra.mxu0 0.0
    %141 = vmatprep.subr.mxu0 0.0
    %142 = vmatpush2.msra.mxu0 0.0
    %143 = vmatprep.subr.mxu0 0.0
    %144 = vmatpush2.msra.mxu0 0.0
    %145 = vmatprep.subr.mxu0 0.0
    %146 = vmatpush2.msra.mxu0 0.0
    %147 = vmatprep.subr.mxu0 0.0
    %148 = vmatpush2.msra.mxu0 0.0
    %149 = vmatprep.subr.mxu0 0.0
    %150 = vmatpush2.msra.mxu0 0.0
    %151 = vmatprep.subr.mxu0 0.0
    %152 = vmatpush2.msra.mxu0 0.0
    %153 = vmatprep.subr.mxu0 0.0
    %154 = vmatpush2.msra.mxu0 0.0
    %155 = vmatprep.subr.mxu0 0.0
    %156 = vmatpush2.msra.mxu0 0.0
    %157 = vmatprep.mubr.f32.mxu0 0.0
    %158 = vmatmul.mubr.f32.gmra.mxu0 %v74
    %v159 = vpop.f32.mrf.mxu0
    %v160 = vadd.f32 0.0, %v159
    %v161 = vpop.f32.mrf.mxu0
    %162 = vdwg.mxu0
    %v163 = vrot.slane %v160, 4
    %v164 = vadd.f32 %v160, %v163
    %v165 = vrot.slane %v164, 2
    %v166 = vadd.f32 %v164, %v165
    %v167 = vrot.slane %v166, 1
    %v168 = vadd.f32 %v166, %v167
    %v169 = vrcp.pop 8.0
    %v170 = vmul.f32 %v168, %v169
    %v171 = vsub.f32 %v160, %v170
    %v172 = vmul.f32 %v171, %v171
    %v173 = vrot.slane %v172, 4
    %v174 = vadd.f32 %v172, %v173
    %v175 = vrot.slane %v174, 2
    %v176 = vadd.f32 %v174, %v175
    %v177 = vrot.slane %v176, 1
    %v178 = vadd.f32 %v176, %v177
    %v179 = vmul.f32 %v178, %v169
    %v180 = vadd.f32 %v179, 1e-05
    %v181 = vrsqrt.pop %v180
    %v182 = vmul.f32 %v171, %v181
    %v184 = vlaneseq
    %v185 = vshrl.u32 %v184, 7
    %v186 = vsub.s32 0, %v185
    %v187 = vrot.slane %v91, %v186
    %v189 = vmul.f32 %v182, %v187
    %v191 = vlaneseq
    %v192 = vshrl.u32 %v191, 7
    %v193 = vsub.s32 0, %v192
    %v194 = vrot.slane %v92, %v193
    %v196 = vadd.f32 %v189, %v194
    %v197 = vmax.f32 %v196, 0.0
    %v198 = vld [vmem:[#allocation5] sm:$0xff]
    %v199 = vld [vmem:[#allocation5 + $0x8] sm:$0xff]
    %v200 = vld [vmem:[#allocation5 + $0x10] sm:$0xff]
    %v201 = vld [vmem:[#allocation5 + $0x18] sm:$0xff]
    %v202 = vld [vmem:[#allocation5 + $0x20] sm:$0xff]
    %v203 = vld [vmem:[#allocation5 + $0x28] sm:$0xff]
    %v204 = vld [vmem:[#allocation5 + $0x30] sm:$0xff]
    %v205 = vld [vmem:[#allocation5 + $0x38] sm:$0xff]
    %v206 = vld [vmem:[#allocation5 + $0x40] sm:$0xff]
    %v207 = vld [vmem:[#allocation5 + $0x48] sm:$0xff]
    %v208 = vld [vmem:[#allocation5 + $0x50] sm:$0xff]
    %v209 = vld [vmem:[#allocation5 + $0x58] sm:$0xff]
    %v210 = vld [vmem:[#allocation5 + $0x60] sm:$0xff]
    %v211 = vld [vmem:[#allocation5 + $0x68] sm:$0xff]
    %v212 = vld [vmem:[#allocation5 + $0x70] sm:$0xff]
    %v213 = vld [vmem:[#allocation5 + $0x78] sm:$0xff]
    %v214 = vld [vmem:[%s5] sm:$0x1]
    %v215 = vld [vmem:[%s6] sm:$0x1]
    %216 = vmatprep.subr.mxu0 0.0
    %217 = vmatpush1.msra.mxu0 %v213
    %218 = vmatprep.subr.mxu0 0.0
    %219 = vmatpush1.msra.mxu0 %v212
    %220 = vmatprep.subr.mxu0 0.0
    %221 = vmatpush1.msra.mxu0 %v211
    %222 = vmatprep.subr.mxu0 0.0
    %223 = vmatpush1.msra.mxu0 %v210
    %224 = vmatprep.subr.mxu0 0.0
    %225 = vmatpush1.msra.mxu0 %v209
    %226 = vmatprep.subr.mxu0 0.0
    %227 = vmatpush1.msra.mxu0 %v208
    %228 = vmatprep.subr.mxu0 0.0
    %229 = vmatpush1.msra.mxu0 %v207
    %230 = vmatprep.subr.mxu0 0.0
    %231 = vmatpush1.msra.mxu0 %v206
    %232 = vmatprep.subr.mxu0 0.0
    %233 = vmatpush1.msra.mxu0 %v205
    %234 = vmatprep.subr.mxu0 0.0
    %235 = vmatpush1.msra.mxu0 %v204
    %236 = vmatprep.subr.mxu0 0.0
    %237 = vmatpush1.msra.mxu0 %v203
    %238 = vmatprep.subr.mxu0 0.0
    %239 = vmatpush1.msra.mxu0 %v202
    %240 = vmatprep.subr.mxu0 0.0
    %241 = vmatpush1.msra.mxu0 %v201
    %242 = vmatprep.subr.mxu0 0.0
    %243 = vmatpush1.msra.mxu0 %v200
    %244 = vmatprep.subr.mxu0 0.0
    %245 = vmatpush1.msra.mxu0 %v199
    %246 = vmatprep.subr.mxu0 0.0
    %247 = vmatpush1.msra.mxu0 %v198
    %248 = vmatprep.subr.mxu0 0.0
    %249 = vmatpush2.msra.mxu0 0.0
    %250 = vmatprep.subr.mxu0 0.0
    %251 = vmatpush2.msra.mxu0 0.0
    %252 = vmatprep.subr.mxu0 0.0
    %253 = vmatpush2.msra.mxu0 0.0
    %254 = vmatprep.subr.mxu0 0.0
    %255 = vmatpush2.msra.mxu0 0.0
    %256 = vmatprep.subr.mxu0 0.0
    %257 = vmatpush2.msra.mxu0 0.0
    %258 = vmatprep.subr.mxu0 0.0
    %259 = vmatpush2.msra.mxu0 0.0
    %260 = vmatprep.subr.mxu0 0.0
    %261 = vmatpush2.msra.mxu0 0.0
    %262 = vmatprep.subr.mxu0 0.0
    %263 = vmatpush2.msra.mxu0 0.0
    %264 = vmatprep.subr.mxu0 0.0
    %265 = vmatpush2.msra.mxu0 0.0
    %266 = vmatprep.subr.mxu0 0.0
    %267 = vmatpush2.msra.mxu0 0.0
    %268 = vmatprep.subr.mxu0 0.0
    %269 = vmatpush2.msra.mxu0 0.0
    %270 = vmatprep.subr.mxu0 0.0
    %271 = vmatpush2.msra.mxu0 0.0
    %272 = vmatprep.subr.mxu0 0.0
    %273 = vmatpush2.msra.mxu0 0.0
    %274 = vmatprep.subr.mxu0 0.0
    %275 = vmatpush2.msra.mxu0 0.0
    %276 = vmatprep.subr.mxu0 0.0
    %277 = vmatpush2.msra.mxu0 0.0
    %278 = vmatprep.subr.mxu0 0.0
    %279 = vmatpush2.msra.mxu0 0.0
    %280 = vmatprep.mubr.f32.mxu0 0.0
    %281 = vmatmul.mubr.f32.gmra.mxu0 %v197
    %v282 = vpop.f32.mrf.mxu0
    %v283 = vadd.f32 0.0, %v282
    %v284 = vpop.f32.mrf.mxu0
    %285 = vdwg.mxu0
    %v286 = vrot.slane %v283, 4
    %v287 = vadd.f32 %v283, %v286
    %v288 = vrot.slane %v287, 2
    %v289 = vadd.f32 %v287, %v288
    %v290 = vrot.slane %v289, 1
    %v291 = vadd.f32 %v289, %v290
    %v292 = vmul.f32 %v291, %v169
    %v293 = vsub.f32 %v283, %v292
    %v294 = vmul.f32 %v293, %v293
    %v295 = vrot.slane %v294, 4
    %v296 = vadd.f32 %v294, %v295
    %v297 = vrot.slane %v296, 2
    %v298 = vadd.f32 %v296, %v297
    %v299 = vrot.slane %v298, 1
    %v300 = vadd.f32 %v298, %v299
    %v301 = vmul.f32 %v300, %v169
    %v302 = vadd.f32 %v301, 1e-05
    %v303 = vrsqrt.pop %v302
    %v304 = vmul.f32 %v293, %v303
    %v306 = vlaneseq
    %v307 = vshrl.u32 %v306, 7
    %v308 = vsub.s32 0, %v307
    %v309 = vrot.slane %v214, %v308
    %v311 = vmul.f32 %v304, %v309
    %v313 = vlaneseq
    %v314 = vshrl.u32 %v313, 7
    %v315 = vsub.s32 0, %v314
    %v316 = vrot.slane %v215, %v315
    %v318 = vadd.f32 %v311, %v316
    %v319 = vmax.f32 %v318, 0.0
    %v320 = vld [vmem:[#allocation7] sm:$0xff]
    %v321 = vld [vmem:[#allocation7 + $0x8] sm:$0xff]
    %v322 = vld [vmem:[#allocation7 + $0x10] sm:$0xff]
    %v323 = vld [vmem:[#allocation7 + $0x18] sm:$0xff]
    %v324 = vld [vmem:[#allocation7 + $0x20] sm:$0xff]
    %v325 = vld [vmem:[#allocation7 + $0x28] sm:$0xff]
    %v326 = vld [vmem:[#allocation7 + $0x30] sm:$0xff]
    %v327 = vld [vmem:[#allocation7 + $0x38] sm:$0xff]
    %v328 = vld [vmem:[#allocation7 + $0x40] sm:$0xff]
    %v329 = vld [vmem:[#allocation7 + $0x48] sm:$0xff]
    %v330 = vld [vmem:[#allocation7 + $0x50] sm:$0xff]
    %v331 = vld [vmem:[#allocation7 + $0x58] sm:$0xff]
    %v332 = vld [vmem:[#allocation7 + $0x60] sm:$0xff]
    %v333 = vld [vmem:[#allocation7 + $0x68] sm:$0xff]
    %v334 = vld [vmem:[#allocation7 + $0x70] sm:$0xff]
    %v335 = vld [vmem:[#allocation7 + $0x78] sm:$0xff]
    %v336 = vld [vmem:[%s8] sm:$0x1]
    %v338 = vlaneseq
    %v339 = vshrl.u32 %v338, 7
    %v340 = vsub.s32 0, %v339
    %v341 = vrot.slane %v336, %v340
    %343 = vmatprep.subr.mxu0 0.0
    %344 = vmatpush1.msra.mxu0 %v335
    %345 = vmatprep.subr.mxu0 0.0
    %346 = vmatpush1.msra.mxu0 %v334
    %347 = vmatprep.subr.mxu0 0.0
    %348 = vmatpush1.msra.mxu0 %v333
    %349 = vmatprep.subr.mxu0 0.0
    %350 = vmatpush1.msra.mxu0 %v332
    %351 = vmatprep.subr.mxu0 0.0
    %352 = vmatpush1.msra.mxu0 %v331
    %353 = vmatprep.subr.mxu0 0.0
    %354 = vmatpush1.msra.mxu0 %v330
    %355 = vmatprep.subr.mxu0 0.0
    %356 = vmatpush1.msra.mxu0 %v329
    %357 = vmatprep.subr.mxu0 0.0
    %358 = vmatpush1.msra.mxu0 %v328
    %359 = vmatprep.subr.mxu0 0.0
    %360 = vmatpush1.msra.mxu0 %v327
    %361 = vmatprep.subr.mxu0 0.0
    %362 = vmatpush1.msra.mxu0 %v326
    %363 = vmatprep.subr.mxu0 0.0
    %364 = vmatpush1.msra.mxu0 %v325
    %365 = vmatprep.subr.mxu0 0.0
    %366 = vmatpush1.msra.mxu0 %v324
    %367 = vmatprep.subr.mxu0 0.0
    %368 = vmatpush1.msra.mxu0 %v323
    %369 = vmatprep.subr.mxu0 0.0
    %370 = vmatpush1.msra.mxu0 %v322
    %371 = vmatprep.subr.mxu0 0.0
    %372 = vmatpush1.msra.mxu0 %v321
    %373 = vmatprep.subr.mxu0 0.0
    %374 = vmatpush1.msra.mxu0 %v320
    %375 = vmatprep.subr.mxu0 0.0
    %376 = vmatpush2.msra.mxu0 0.0
    %377 = vmatprep.subr.mxu0 0.0
    %378 = vmatpush2.msra.mxu0 0.0
    %379 = vmatprep.subr.mxu0 0.0
    %380 = vmatpush2.msra.mxu0 0.0
    %381 = vmatprep.subr.mxu0 0.0
    %382 = vmatpush2.msra.mxu0 0.0
    %383 = vmatprep.subr.mxu0 0.0
    %384 = vmatpush2.msra.mxu0 0.0
    %385 = vmatprep.subr.mxu0 0.0
    %386 = vmatpush2.msra.mxu0 0.0
    %387 = vmatprep.subr.mxu0 0.0
    %388 = vmatpush2.msra.mxu0 0.0
    %389 = vmatprep.subr.mxu0 0.0
    %390 = vmatpush2.msra.mxu0 0.0
    %391 = vmatprep.subr.mxu0 0.0
    %392 = vmatpush2.msra.mxu0 0.0
    %393 = vmatprep.subr.mxu0 0.0
    %394 = vmatpush2.msra.mxu0 0.0
    %395 = vmatprep.subr.mxu0 0.0
    %396 = vmatpush2.msra.mxu0 0.0
    %397 = vmatprep.subr.mxu0 0.0
    %398 = vmatpush2.msra.mxu0 0.0
    %399 = vmatprep.subr.mxu0 0.0
    %400 = vmatpush2.msra.mxu0 0.0
    %401 = vmatprep.subr.mxu0 0.0
    %402 = vmatpush2.msra.mxu0 0.0
    %403 = vmatprep.subr.mxu0 0.0
    %404 = vmatpush2.msra.mxu0 0.0
    %405 = vmatprep.subr.mxu0 0.0
    %406 = vmatpush2.msra.mxu0 0.0
    %407 = vmatprep.mubr.f32.mxu0 0.0
    %408 = vmatmul.mubr.f32.gmra.mxu0 %v319
    %v409 = vpop.f32.mrf.mxu0
    %v410 = vadd.f32 %v341, %v409
    %v411 = vpop.f32.mrf.mxu0
    %412 = vdwg.mxu0
    %v413 = vtanh.pop %v410
    %414 = vst [vmem:[#allocation8] sm:$0xff] %v413
    // Predicated region
    $region50: #{generator_forward.1} parent=1 // pred_check
      _
    $region51: #{generator_forward.1} parent=1 // pred_check_branch
      %416 = sbr.rel (0) target = $region53
    $region52: #{generator_forward.1} parent=1 // pred_region
      %s418 = ssub.s32 128, 128
      %419 = vsyncadd [#allocation4], %s418
      %s421 = sshll.u32 [#allocation8], 4
      %s422 = int_to_ptr.vmem [resolvable:$true] %s421
      %424 = dma.vmem_to_hbm [thread:$0]  %s422, 128, %s9, [#allocation4]
    $region53: #{generator_forward.1} parent=1 // pred_fallthru
      _
    // Predicated region
    $region54: #{generator_forward.1} parent=1 // pred_check
      _
    $region55: #{generator_forward.1} parent=1 // pred_check_branch
      %426 = sbr.rel (0) target = $region57
    $region56: #{generator_forward.1} parent=1 // pred_region
      %427 = dma.done [#allocation4], 128
    $region57: #{generator_forward.1} parent=1 // pred_fallthru
      _
    %428 = vsyncpa [#allocation3], 1
    %429 = vsyncpa [#allocation6], 1
    %430 = vsyncpa [#allocation4], 1

</llo_original>
